<compile_context>
chip_gen: v5e
topology: v5e:2x2
jax: 0.10.0
libtpu: 0.0.40
codegen_flags: <defaults>
</compile_context>

<pallas_src>
import jax
import jax.numpy as jnp
from jax.experimental import pallas as pl
from jax.experimental.pallas import tpu as pltpu

ATTR_NUM = 18
ATTR_PRESENT_DIM = 5
HIDDEN_DIM = 100
USER_EMB_DIM = ATTR_NUM          # 18
VOCAB = 2 * ATTR_NUM             # 36

LANE = 128
FUSED_DIM = ATTR_NUM * VOCAB     # 648
FUSED_PAD = 768                  # round_up(648, 128)
HID_PAD = 128                    # round_up(100, 128)
OUT_PAD = 128                    # round_up(18, 128)


def _round_up(x, m):
    return (x + m - 1) // m * m


# --------------------------------------------------------------------------
# Kernel
# --------------------------------------------------------------------------
def generator_kernel(ids_ref, colmod_ref, sel_ref, w1_ref,
                     w2_ref, b2_ref, w3_ref, b3_ref, out_ref):
    # ids < 36 are exact in bf16; sel is 0/1 -> single-pass bf16 MXU matmul
    # with exact f32 accumulation.
    ids_bf = ids_ref[...].astype(jnp.bfloat16)                     # [TB, 18]
    # r[b, j] = attribute_id[b, j // VOCAB]  via a selection matmul.
    r = jnp.dot(ids_bf, sel_ref[...], preferred_element_type=jnp.float32)  # [TB, 768]

    # one_hot[b, a*VOCAB + v] = (attribute_id[b, a] == v); padded lanes get
    # colmod == -1 so they never match.  Built directly in bf16 (exact 0/1).
    one_hot = (r == colmod_ref[...]).astype(jnp.bfloat16)          # [TB, 768]

    # sigmoid(x) = 1 / (1 + exp(-x)); exp and approx reciprocal both go to the
    # EUP slot, keeping the VALU free for the 768-wide compare above.
    def sigmoid(x):
        return pl.reciprocal(1.0 + jnp.exp(-x), approx=True)

    # Layer 1: b1 is pre-folded into the fused weight (18 ones per row).
    z2 = sigmoid(jnp.dot(one_hot, w1_ref[...],
                         preferred_element_type=jnp.float32))      # [TB, 128]
    z3 = sigmoid(jnp.dot(z2.astype(jnp.bfloat16), w2_ref[...],
                         preferred_element_type=jnp.float32)
                 + b2_ref[...])                                    # [TB, 128]
    uc = sigmoid(jnp.dot(z3.astype(jnp.bfloat16), w3_ref[...],
                         preferred_element_type=jnp.float32)
                 + b3_ref[...])                                    # [TB, 128]

    out_ref[...] = uc.astype(out_ref.dtype)                        # lane-dense store


# --------------------------------------------------------------------------
# Parameter preparation (runs once, outside the kernel)
# --------------------------------------------------------------------------
def _pad2(x, rows, cols):
    return jnp.zeros((rows, cols), x.dtype).at[: x.shape[0], : x.shape[1]].set(x)


def fuse_and_pad_params(params):
    """Fold embedding + b1 into layer-1, pad to 128-lane tiles, cast weights to bf16."""
    emb, w1 = params["emb"], params["w1"]                 # [36, 5], [90, 100]
    w1_blocks = w1.reshape(ATTR_NUM, ATTR_PRESENT_DIM, HIDDEN_DIM)
    fused = jnp.einsum("vd,adh->avh", emb, w1_blocks)     # [18, 36, 100]
    fused = fused.reshape(FUSED_DIM, HIDDEN_DIM)          # [648, 100]
    # Fold b1: every one-hot row has exactly ATTR_NUM ones in real columns,
    # so adding b1/ATTR_NUM to each real row reproduces the bias exactly.
    fused = fused + params["b1"] / ATTR_NUM               # [648, 100]

    col = jnp.arange(FUSED_PAD, dtype=jnp.int32)
    # per-lane target value (j % 36), -1 on padding lanes so they never match
    colmod = jnp.where(col < FUSED_DIM, col % VOCAB, -1).astype(jnp.float32)[None, :]
    # selection matrix: sel[a, j] = 1 iff j // 36 == a (0 on padding lanes)
    sel = (col[None, :] // VOCAB) == jnp.arange(ATTR_NUM, dtype=jnp.int32)[:, None]
    sel = jnp.where(col[None, :] < FUSED_DIM, sel, False)

    return dict(
        colmod=colmod,                                               # [1, 768]  f32
        sel=sel.astype(jnp.bfloat16),                                # [18, 768] bf16
        w1f=_pad2(fused, FUSED_PAD, HID_PAD).astype(jnp.bfloat16),   # [768, 128] bf16
        w2=_pad2(params["w2"], HID_PAD, HID_PAD).astype(jnp.bfloat16),  # [128, 128]
        b2=_pad2(params["b2"], 1, HID_PAD),                          # [1, 128]  f32
        w3=_pad2(params["w3"], HID_PAD, OUT_PAD).astype(jnp.bfloat16),  # [128, 128]
        b3=_pad2(params["b3"], 1, OUT_PAD),                          # [1, 128]  f32
    )


# --------------------------------------------------------------------------
# Wrapper
# --------------------------------------------------------------------------
def generator_forward(attribute_id, kparams, *, batch_tile=1024):
    B = attribute_id.shape[0]
    # Choose tb so (a) large batches get big tiles that amortize grid-step
    # overhead, and (b) batches that would fit in one tile still produce >= 2
    # grid steps, so the "parallel" axis can shard across 2 TCs on v7x.
    tb = min(batch_tile, max(8, _round_up(pl.cdiv(B, 2), 8)))
    b_pad = _round_up(B, tb)

    ids = attribute_id.astype(jnp.int32)
    if b_pad != B:
        ids = jnp.zeros((b_pad, ATTR_NUM), jnp.int32).at[:B].set(ids)

    const = lambda i: (0, 0)                              # weights stay resident
    out = pl.pallas_call(
        generator_kernel,
        out_shape=jax.ShapeDtypeStruct((b_pad, OUT_PAD), jnp.float32),
        grid_spec=pltpu.PrefetchScalarGridSpec(
            num_scalar_prefetch=0,
            grid=(b_pad // tb,),
            in_specs=[
                pl.BlockSpec((tb, ATTR_NUM), lambda i: (i, 0)),      # ids (tiled)
                pl.BlockSpec((1, FUSED_PAD), const),                 # colmod
                pl.BlockSpec((ATTR_NUM, FUSED_PAD), const),          # sel (bf16)
                pl.BlockSpec((FUSED_PAD, HID_PAD), const),           # W1_fused (bf16)
                pl.BlockSpec((HID_PAD, HID_PAD), const),             # w2 (bf16)
                pl.BlockSpec((1, HID_PAD), const),                   # b2
                pl.BlockSpec((HID_PAD, OUT_PAD), const),             # w3 (bf16)
                pl.BlockSpec((1, OUT_PAD), const),                   # b3
            ],
            out_specs=pl.BlockSpec((tb, OUT_PAD), lambda i: (i, 0)),
        ),
        compiler_params=pltpu.CompilerParams(
            dimension_semantics=("parallel",),
            # Explicit scoped-VMEM limit so larger batch tiles also fit on
            # v5e (default 16 MiB) without the compiler rejecting/falling back.
            vmem_limit_bytes=32 * 1024 * 1024,
        ),
    )(ids, kparams["colmod"], kparams["sel"], kparams["w1f"],
      kparams["w2"], kparams["b2"], kparams["w3"], kparams["b3"])

    return out[:B, :USER_EMB_DIM]


# --------------------------------------------------------------------------
# Init + pure-JAX reference (matches the PyTorch module semantics, f32)
# --------------------------------------------------------------------------
def _xavier_normal(key, shape, gain=1.0):
    # torch.nn.init.xavier_normal_: std = gain * sqrt(2 / (fan_in + fan_out))
    fan_out, fan_in = shape[0], shape[1]
    std = gain * (2.0 / (fan_in + fan_out)) ** 0.5
    return std * jax.random.normal(key, shape, dtype=jnp.float32)


def init_params(key):
    ks = jax.random.split(key, 7)
    emb = _xavier_normal(ks[0], (VOCAB, ATTR_PRESENT_DIM))
    # Linear weights (torch shape [out, in]) stored transposed as [in, out].
    w1 = _xavier_normal(ks[1], (HIDDEN_DIM, ATTR_NUM * ATTR_PRESENT_DIM)).T
    w2 = _xavier_normal(ks[2], (HIDDEN_DIM, HIDDEN_DIM)).T
    w3 = _xavier_normal(ks[3], (USER_EMB_DIM, HIDDEN_DIM)).T
    b1 = _xavier_normal(ks[4], (1, HIDDEN_DIM))
    b2 = _xavier_normal(ks[5], (1, HIDDEN_DIM))
    b3 = _xavier_normal(ks[6], (1, USER_EMB_DIM))
    return dict(emb=emb, w1=w1, b1=b1, w2=w2, b2=b2, w3=w3, b3=b3)


def reference_forward(attribute_id, p):
    attr_present = jnp.take(p["emb"], attribute_id, axis=0)          # [B, A, D]
    z1 = attr_present.reshape(attribute_id.shape[0], ATTR_NUM * ATTR_PRESENT_DIM)
    z2 = jax.nn.sigmoid(z1 @ p["w1"] + p["b1"])
    z3 = jax.nn.sigmoid(z2 @ p["w2"] + p["b2"])
    return jax.nn.sigmoid(z3 @ p["w3"] + p["b3"])


if __name__ == "__main__":
    key = jax.random.PRNGKey(0)
    k_param, k_ids = jax.random.split(key)

    params = init_params(k_param)
    kparams = fuse_and_pad_params(params)

    B = 8
    attribute_id = jax.random.randint(k_ids, (B, ATTR_NUM), 0, VOCAB, dtype=jnp.int32)

    out = jax.block_until_ready(generator_forward(attribute_id, kparams))
    ref = jax.block_until_ready(reference_forward(attribute_id, params))

    assert out.shape == (B, USER_EMB_DIM), out.shape
    # bf16 weights + approx-reciprocal sigmoid: loosened tolerance (outputs in (0,1)).
    assert jnp.allclose(out, ref, atol=2e-2, rtol=2e-2), "mismatch vs JAX reference"

    print("KERNEL_OK")
</pallas_src>

<mosaic_0001>
module attributes {stable_mosaic.version = 11 : i64} {
  func.func @generator_kernel(%arg0: i32, %arg1: memref<8x18xi32, #tpu.memory_space<vmem>>, %arg2: memref<1x768xf32, #tpu.memory_space<vmem>>, %arg3: memref<18x768xbf16, #tpu.memory_space<vmem>>, %arg4: memref<768x128xbf16, #tpu.memory_space<vmem>>, %arg5: memref<128x128xbf16, #tpu.memory_space<vmem>>, %arg6: memref<1x128xf32, #tpu.memory_space<vmem>>, %arg7: memref<128x128xbf16, #tpu.memory_space<vmem>>, %arg8: memref<1x128xf32, #tpu.memory_space<vmem>>, %arg9: memref<8x128xf32, #tpu.memory_space<vmem>>) attributes {dimension_semantics = [#tpu.dimension_semantics<parallel>], iteration_bounds = array<i64: 1>, scalar_prefetch = 0 : i64, scratch_operands = 0 : i64, tpu.core_type = #tpu.core_type<tc>, window_params = [{transform_indices = @transform_0, window_bounds = array<i64: 8, 18>}, {pipeline_mode = #tpu.pipeline_mode<synchronous>, transform_indices = @transform_1, window_bounds = array<i64: 1, 768>}, {pipeline_mode = #tpu.pipeline_mode<synchronous>, transform_indices = @transform_2, window_bounds = array<i64: 18, 768>}, {pipeline_mode = #tpu.pipeline_mode<synchronous>, transform_indices = @transform_3, window_bounds = array<i64: 768, 128>}, {pipeline_mode = #tpu.pipeline_mode<synchronous>, transform_indices = @transform_4, window_bounds = array<i64: 128, 128>}, {pipeline_mode = #tpu.pipeline_mode<synchronous>, transform_indices = @transform_5, window_bounds = array<i64: 1, 128>}, {pipeline_mode = #tpu.pipeline_mode<synchronous>, transform_indices = @transform_6, window_bounds = array<i64: 128, 128>}, {pipeline_mode = #tpu.pipeline_mode<synchronous>, transform_indices = @transform_7, window_bounds = array<i64: 1, 128>}, {transform_indices = @transform_8, window_bounds = array<i64: 8, 128>}]} {
    %c0 = arith.constant 0 : index
    %c0_0 = arith.constant 0 : index
    %0 = vector.load %arg1[%c0, %c0_0] : memref<8x18xi32, #tpu.memory_space<vmem>>, vector<8x18xi32>
    %1 = arith.sitofp %0 : vector<8x18xi32> to vector<8x18xbf16>
    %c0_1 = arith.constant 0 : index
    %c0_2 = arith.constant 0 : index
    %2 = vector.load %arg3[%c0_1, %c0_2] : memref<18x768xbf16, #tpu.memory_space<vmem>>, vector<18x768xbf16>
    %cst = arith.constant dense<0.000000e+00> : vector<8x768xf32>
    %3 = tpu.matmul %1, %2, %cst {dimension_numbers = #tpu.dot_dimension_numbers<[1], [0], [0], [1], [0, 0, 1, 1], [], []>} : vector<8x18xbf16>, vector<18x768xbf16>, vector<8x768xf32> -> vector<8x768xf32>
    %c0_3 = arith.constant 0 : index
    %c0_4 = arith.constant 0 : index
    %4 = vector.load %arg2[%c0_3, %c0_4] : memref<1x768xf32, #tpu.memory_space<vmem>>, vector<1x768xf32>
    %5 = vector.broadcast %4 : vector<1x768xf32> to vector<8x768xf32>
    %6 = arith.cmpf oeq, %3, %5 : vector<8x768xf32>
    %7 = arith.extui %6 : vector<8x768xi1> to vector<8x768xi32>
    %8 = arith.sitofp %7 : vector<8x768xi32> to vector<8x768xf32>
    %9 = arith.truncf %8 : vector<8x768xf32> to vector<8x768xbf16>
    %c0_5 = arith.constant 0 : index
    %c0_6 = arith.constant 0 : index
    %10 = vector.load %arg4[%c0_5, %c0_6] : memref<768x128xbf16, #tpu.memory_space<vmem>>, vector<768x128xbf16>
    %cst_7 = arith.constant dense<0.000000e+00> : vector<8x128xf32>
    %11 = tpu.matmul %9, %10, %cst_7 {dimension_numbers = #tpu.dot_dimension_numbers<[1], [0], [0], [1], [0, 0, 1, 1], [], []>} : vector<8x768xbf16>, vector<768x128xbf16>, vector<8x128xf32> -> vector<8x128xf32>
    %cst_8 = arith.constant 0.000000e+00 : f32
    %12 = vector.broadcast %cst_8 : f32 to vector<8x128xf32>
    %13 = arith.subf %12, %11 : vector<8x128xf32>
    %14 = math.exp %13 : vector<8x128xf32>
    %cst_9 = arith.constant 1.000000e+00 : f32
    %15 = vector.broadcast %cst_9 : f32 to vector<8x128xf32>
    %16 = arith.addf %15, %14 : vector<8x128xf32>
    %17 = tpu.reciprocal %16 {approx = true} : vector<8x128xf32> -> vector<8x128xf32>
    %18 = arith.truncf %17 : vector<8x128xf32> to vector<8x128xbf16>
    %c0_10 = arith.constant 0 : index
    %c0_11 = arith.constant 0 : index
    %19 = vector.load %arg5[%c0_10, %c0_11] : memref<128x128xbf16, #tpu.memory_space<vmem>>, vector<128x128xbf16>
    %cst_12 = arith.constant dense<0.000000e+00> : vector<8x128xf32>
    %20 = tpu.matmul %18, %19, %cst_12 {dimension_numbers = #tpu.dot_dimension_numbers<[1], [0], [0], [1], [0, 0, 1, 1], [], []>} : vector<8x128xbf16>, vector<128x128xbf16>, vector<8x128xf32> -> vector<8x128xf32>
    %c0_13 = arith.constant 0 : index
    %c0_14 = arith.constant 0 : index
    %21 = vector.load %arg6[%c0_13, %c0_14] : memref<1x128xf32, #tpu.memory_space<vmem>>, vector<1x128xf32>
    %22 = vector.broadcast %21 : vector<1x128xf32> to vector<8x128xf32>
    %23 = arith.addf %20, %22 : vector<8x128xf32>
    %cst_15 = arith.constant 0.000000e+00 : f32
    %24 = vector.broadcast %cst_15 : f32 to vector<8x128xf32>
    %25 = arith.subf %24, %23 : vector<8x128xf32>
    %26 = math.exp %25 : vector<8x128xf32>
    %cst_16 = arith.constant 1.000000e+00 : f32
    %27 = vector.broadcast %cst_16 : f32 to vector<8x128xf32>
    %28 = arith.addf %27, %26 : vector<8x128xf32>
    %29 = tpu.reciprocal %28 {approx = true} : vector<8x128xf32> -> vector<8x128xf32>
    %30 = arith.truncf %29 : vector<8x128xf32> to vector<8x128xbf16>
    %c0_17 = arith.constant 0 : index
    %c0_18 = arith.constant 0 : index
    %31 = vector.load %arg7[%c0_17, %c0_18] : memref<128x128xbf16, #tpu.memory_space<vmem>>, vector<128x128xbf16>
    %cst_19 = arith.constant dense<0.000000e+00> : vector<8x128xf32>
    %32 = tpu.matmul %30, %31, %cst_19 {dimension_numbers = #tpu.dot_dimension_numbers<[1], [0], [0], [1], [0, 0, 1, 1], [], []>} : vector<8x128xbf16>, vector<128x128xbf16>, vector<8x128xf32> -> vector<8x128xf32>
    %c0_20 = arith.constant 0 : index
    %c0_21 = arith.constant 0 : index
    %33 = vector.load %arg8[%c0_20, %c0_21] : memref<1x128xf32, #tpu.memory_space<vmem>>, vector<1x128xf32>
    %34 = vector.broadcast %33 : vector<1x128xf32> to vector<8x128xf32>
    %35 = arith.addf %32, %34 : vector<8x128xf32>
    %cst_22 = arith.constant 0.000000e+00 : f32
    %36 = vector.broadcast %cst_22 : f32 to vector<8x128xf32>
    %37 = arith.subf %36, %35 : vector<8x128xf32>
    %38 = math.exp %37 : vector<8x128xf32>
    %cst_23 = arith.constant 1.000000e+00 : f32
    %39 = vector.broadcast %cst_23 : f32 to vector<8x128xf32>
    %40 = arith.addf %39, %38 : vector<8x128xf32>
    %41 = tpu.reciprocal %40 {approx = true} : vector<8x128xf32> -> vector<8x128xf32>
    %c0_24 = arith.constant 0 : index
    %c0_25 = arith.constant 0 : index
    %42 = vector.load %arg9[%c0_24, %c0_25] : memref<8x128xf32, #tpu.memory_space<vmem>>, vector<8x128xf32>
    tpu.vector_store %arg9[%c0_24, %c0_25], %41 {strides = array<i32>} : memref<8x128xf32, #tpu.memory_space<vmem>>, vector<8x128xf32>,
    return
  }
  func.func @transform_0(%arg0: i32) -> (i32, i32) {
    %c0_i32 = arith.constant 0 : i32
    %c0_i32_0 = arith.constant 0 : i32
    return %arg0, %c0_i32 : i32, i32
  }
  func.func @transform_1(%arg0: i32) -> (i32, i32) {
    %c0_i32 = arith.constant 0 : i32
    %c0_i32_0 = arith.constant 0 : i32
    %c0_i32_1 = arith.constant 0 : i32
    return %c0_i32, %c0_i32_0 : i32, i32
  }
  func.func @transform_2(%arg0: i32) -> (i32, i32) {
    %c0_i32 = arith.constant 0 : i32
    %c0_i32_0 = arith.constant 0 : i32
    %c0_i32_1 = arith.constant 0 : i32
    return %c0_i32, %c0_i32_0 : i32, i32
  }
  func.func @transform_3(%arg0: i32) -> (i32, i32) {
    %c0_i32 = arith.constant 0 : i32
    %c0_i32_0 = arith.constant 0 : i32
    %c0_i32_1 = arith.constant 0 : i32
    return %c0_i32, %c0_i32_0 : i32, i32
  }
  func.func @transform_4(%arg0: i32) -> (i32, i32) {
    %c0_i32 = arith.constant 0 : i32
    %c0_i32_0 = arith.constant 0 : i32
    %c0_i32_1 = arith.constant 0 : i32
    return %c0_i32, %c0_i32_0 : i32, i32
  }
  func.func @transform_5(%arg0: i32) -> (i32, i32) {
    %c0_i32 = arith.constant 0 : i32
    %c0_i32_0 = arith.constant 0 : i32
    %c0_i32_1 = arith.constant 0 : i32
    return %c0_i32, %c0_i32_0 : i32, i32
  }
  func.func @transform_6(%arg0: i32) -> (i32, i32) {
    %c0_i32 = arith.constant 0 : i32
    %c0_i32_0 = arith.constant 0 : i32
    %c0_i32_1 = arith.constant 0 : i32
    return %c0_i32, %c0_i32_0 : i32, i32
  }
  func.func @transform_7(%arg0: i32) -> (i32, i32) {
    %c0_i32 = arith.constant 0 : i32
    %c0_i32_0 = arith.constant 0 : i32
    %c0_i32_1 = arith.constant 0 : i32
    return %c0_i32, %c0_i32_0 : i32, i32
  }
  func.func @transform_8(%arg0: i32) -> (i32, i32) {
    %c0_i32 = arith.constant 0 : i32
    %c0_i32_0 = arith.constant 0 : i32
    return %arg0, %c0_i32 : i32, i32
  }
}

</mosaic_0001>

<llo_original>
// kernel: tpu_custom_call.1
$region0: #{tpu_custom_call.1}
  #allocation0 [shape = 'u32[]', space=smem, size = 0x4, offset = 0x4, fixed_abs, tag = 'smem constant byte address 0x4 - core index']
  #allocation1 [shape = 'u32[72,128]{1,0:T(1,128)}', space=vmem, size = 0x9000, scoped, tag = 'internal scratch']
  %s0 = inlined_call_operand.hbm [shape: s32[8,18], index: 0, kind: input, shape index: {}]
  %s1 = inlined_call_operand.hbm [shape: f32[1,768], index: 1, kind: input, shape index: {}]
  %s2 = inlined_call_operand.hbm [shape: bf16[18,768], index: 2, kind: input, shape index: {}]
  %s3 = inlined_call_operand.hbm [shape: bf16[768,128], index: 3, kind: input, shape index: {}]
  %s4 = inlined_call_operand.hbm [shape: bf16[128,128], index: 4, kind: input, shape index: {}]
  %s5 = inlined_call_operand.vmem [shape: f32[1,128], index: 5, kind: input, shape index: {}]
  %s6 = inlined_call_operand.hbm [shape: bf16[128,128], index: 6, kind: input, shape index: {}]
  %s7 = inlined_call_operand.vmem [shape: f32[1,128], index: 7, kind: input, shape index: {}]
  %s8 = inlined_call_operand.hbm [shape: f32[8,128], index: 8, kind: output, shape index: {}]
  %s9 = sld [smem:[#allocation0]]
  $region66: #{tpu_custom_call.1} parent=0
    _
  %s11 = ssub.s32 1, %s9
  %s12 = scalar_select 0, %s11, %s9
  $region1: #{tpu_custom_call.1} parent=0
    #allocation2 [shape = 'u8[4096]{0}', space=vmem, size = 0x1000, scoped, tag = 'input window, operand 0, single buffered']
    #allocation3 [shape = 's32[1]{0}', space=sflag, size = 0x4, scoped, tag = 'scoped memory for tpu_custom_call.1']
    #allocation4 [shape = 's32[1]{0}', space=sflag, size = 0x4, scoped, tag = 'scoped memory for tpu_custom_call.1']
    #allocation5 [shape = 'u8[3072]{0}', space=vmem, size = 0xc00, scoped, tag = 'input window, operand 1, single buffered']
    #allocation6 [shape = 's32[1]{0}', space=sflag, size = 0x4, scoped, tag = 'scoped memory for tpu_custom_call.1']
    #allocation7 [shape = 'u8[36864]{0}', space=vmem, size = 0x9000, scoped, tag = 'input window, operand 2, single buffered']
    #allocation8 [shape = 'u8[196608]{0}', space=vmem, size = 0x30000, scoped, tag = 'input window, operand 3, single buffered']
    #allocation9 [shape = 's32[1]{0}', space=sflag, size = 0x4, scoped, tag = 'scoped memory for tpu_custom_call.1']
    #allocation10 [shape = 'u8[32768]{0}', space=vmem, size = 0x8000, scoped, tag = 'input window, operand 4, single buffered']
    #allocation11 [shape = 'u8[32768]{0}', space=vmem, size = 0x8000, scoped, tag = 'input window, operand 6, single buffered']
    #allocation12 [shape = 's32[1]{0}', space=sflag, size = 0x4, scoped, tag = 'scoped memory for tpu_custom_call.1']
    #allocation13 [shape = 'u8[4096]{0}', space=vmem, size = 0x1000, scoped, tag = 'output window, operand 0, single buffered']
    %13 = vsyncpa [#allocation3], 0
    %14 = vsyncpa [#allocation6], 0
    %15 = vsyncpa [#allocation9], 0
    %16 = vsyncpa [#allocation12], 0
    %17 = vsyncpa [#allocation4], 0
    // Predicated region
    $region2: #{tpu_custom_call.1} parent=1 // pred_check
      _
    $region3: #{tpu_custom_call.1} parent=1 // pred_check_branch
      %19 = sbr.rel (0) target = $region5
    $region4: #{tpu_custom_call.1} parent=1 // pred_region
      %21 = vsyncadd [#allocation3], 0
      %s23 = sshll.u32 %s0, 4
      %s24 = int_to_ptr.hbm [resolvable:$true] %s23
      %s25 = sshll.u32 [#allocation2], 4
      %s26 = int_to_ptr.vmem [resolvable:$true] %s25
      %28 = dma.hbm_to_vmem [thread:$0]  %s24, 128, %s26, [#allocation3]
    $region5: #{tpu_custom_call.1} parent=1 // pred_fallthru
      _
    // Predicated region
    $region6: #{tpu_custom_call.1} parent=1 // pred_check
      _
    $region7: #{tpu_custom_call.1} parent=1 // pred_check_branch
      %30 = sbr.rel (0) target = $region9
    $region8: #{tpu_custom_call.1} parent=1 // pred_region
      %32 = vsyncadd [#allocation6], 0
      %s34 = sshll.u32 %s1, 4
      %s35 = int_to_ptr.hbm [resolvable:$true] %s34
      %s36 = sshll.u32 [#allocation5], 4
      %s37 = int_to_ptr.vmem [resolvable:$true] %s36
      %39 = dma.hbm_to_vmem [thread:$0]  %s35, 96, %s37, [#allocation6]
    $region9: #{tpu_custom_call.1} parent=1 // pred_fallthru
      _
    // Predicated region
    $region10: #{tpu_custom_call.1} parent=1 // pred_check
      _
    $region11: #{tpu_custom_call.1} parent=1 // pred_check_branch
      %41 = sbr.rel (0) target = $region13
    $region12: #{tpu_custom_call.1} parent=1 // pred_region
      %43 = vsyncadd [#allocation6], 0
      %s44 = sshll.u32 %s2, 4
      %s45 = int_to_ptr.hbm [resolvable:$true] %s44
      %s46 = sshll.u32 [#allocation7], 4
      %s47 = int_to_ptr.vmem [resolvable:$true] %s46
      %52 = dma.hbm_to_vmem [thread:$0]  %s45, 1152, %s47, [#allocation6], 384, 384, 24
    $region13: #{tpu_custom_call.1} parent=1 // pred_fallthru
      _
    // Predicated region
    $region14: #{tpu_custom_call.1} parent=1 // pred_check
      _
    $region15: #{tpu_custom_call.1} parent=1 // pred_check_branch
      %54 = sbr.rel (0) target = $region17
    $region16: #{tpu_custom_call.1} parent=1 // pred_region
      %56 = vsyncadd [#allocation9], 0
      %s57 = sshll.u32 %s3, 4
      %s58 = int_to_ptr.hbm [resolvable:$true] %s57
      %s59 = sshll.u32 [#allocation8], 4
      %s60 = int_to_ptr.vmem [resolvable:$true] %s59
      %65 = dma.hbm_to_vmem [thread:$0]  %s58, 6144, %s60, [#allocation9], 64, 64, 4
    $region17: #{tpu_custom_call.1} parent=1 // pred_fallthru
      _
    // Predicated region
    $region18: #{tpu_custom_call.1} parent=1 // pred_check
      _
    $region19: #{tpu_custom_call.1} parent=1 // pred_check_branch
      %67 = sbr.rel (0) target = $region21
    $region20: #{tpu_custom_call.1} parent=1 // pred_region
      %69 = vsyncadd [#allocation9], 0
      %s70 = sshll.u32 %s4, 4
      %s71 = int_to_ptr.hbm [resolvable:$true] %s70
      %s72 = sshll.u32 [#allocation10], 4
      %s73 = int_to_ptr.vmem [resolvable:$true] %s72
      %78 = dma.hbm_to_vmem [thread:$0]  %s71, 1024, %s73, [#allocation9], 64, 64, 4
    $region21: #{tpu_custom_call.1} parent=1 // pred_fallthru
      _
    // Predicated region
    $region22: #{tpu_custom_call.1} parent=1 // pred_check
      _
    $region23: #{tpu_custom_call.1} parent=1 // pred_check_branch
      %80 = sbr.rel (0) target = $region25
    $region24: #{tpu_custom_call.1} parent=1 // pred_region
      _
    $region25: #{tpu_custom_call.1} parent=1 // pred_fallthru
      _
    // Predicated region
    $region26: #{tpu_custom_call.1} parent=1 // pred_check
      _
    $region27: #{tpu_custom_call.1} parent=1 // pred_check_branch
      %82 = sbr.rel (0) target = $region29
    $region28: #{tpu_custom_call.1} parent=1 // pred_region
      %84 = vsyncadd [#allocation12], 0
      %s85 = sshll.u32 %s6, 4
      %s86 = int_to_ptr.hbm [resolvable:$true] %s85
      %s87 = sshll.u32 [#allocation11], 4
      %s88 = int_to_ptr.vmem [resolvable:$true] %s87
      %93 = dma.hbm_to_vmem [thread:$0]  %s86, 1024, %s88, [#allocation12], 64, 64, 4
    $region29: #{tpu_custom_call.1} parent=1 // pred_fallthru
      _
    // Predicated region
    $region30: #{tpu_custom_call.1} parent=1 // pred_check
      _
    $region31: #{tpu_custom_call.1} parent=1 // pred_check_branch
      %95 = sbr.rel (0) target = $region33
    $region32: #{tpu_custom_call.1} parent=1 // pred_region
      _
    $region33: #{tpu_custom_call.1} parent=1 // pred_fallthru
      _
    // Predicated region
    $region34: #{tpu_custom_call.1} parent=1 // pred_check
      _
    $region35: #{tpu_custom_call.1} parent=1 // pred_check_branch
      %97 = sbr.rel (0) target = $region37
    $region36: #{tpu_custom_call.1} parent=1 // pred_region
      %99 = dma.done [#allocation3], 128
    $region37: #{tpu_custom_call.1} parent=1 // pred_fallthru
      _
    // Predicated region
    $region38: #{tpu_custom_call.1} parent=1 // pred_check
      _
    $region39: #{tpu_custom_call.1} parent=1 // pred_check_branch
      %101 = sbr.rel (0) target = $region41
    $region40: #{tpu_custom_call.1} parent=1 // pred_region
      %103 = dma.done [#allocation6], 96
    $region41: #{tpu_custom_call.1} parent=1 // pred_fallthru
      _
    // Predicated region
    $region42: #{tpu_custom_call.1} parent=1 // pred_check
      _
    $region43: #{tpu_custom_call.1} parent=1 // pred_check_branch
      %105 = sbr.rel (0) target = $region45
    $region44: #{tpu_custom_call.1} parent=1 // pred_region
      %107 = dma.done [#allocation6], 1152
    $region45: #{tpu_custom_call.1} parent=1 // pred_fallthru
      _
    // Predicated region
    $region46: #{tpu_custom_call.1} parent=1 // pred_check
      _
    $region47: #{tpu_custom_call.1} parent=1 // pred_check_branch
      %109 = sbr.rel (0) target = $region49
    $region48: #{tpu_custom_call.1} parent=1 // pred_region
      %111 = dma.done [#allocation9], 6144
    $region49: #{tpu_custom_call.1} parent=1 // pred_fallthru
      _
    // Predicated region
    $region50: #{tpu_custom_call.1} parent=1 // pred_check
      _
    $region51: #{tpu_custom_call.1} parent=1 // pred_check_branch
      %113 = sbr.rel (0) target = $region53
    $region52: #{tpu_custom_call.1} parent=1 // pred_region
      %115 = dma.done [#allocation9], 1024
    $region53: #{tpu_custom_call.1} parent=1 // pred_fallthru
      _
    // Predicated region
    $region54: #{tpu_custom_call.1} parent=1 // pred_check
      _
    $region55: #{tpu_custom_call.1} parent=1 // pred_check_branch
      %117 = sbr.rel (0) target = $region57
    $region56: #{tpu_custom_call.1} parent=1 // pred_region
      %119 = dma.done [#allocation12], 1024
    $region57: #{tpu_custom_call.1} parent=1 // pred_fallthru
      _
    %v121 = vld [vmem:[#allocation2] sm:$0xff]
    %v122 = vcvt.s32.f32 %v121
    %v123 = vpack.c.bf16 %v122, %v122
    %v124 = vld [vmem:[#allocation7] sm:$0xff]
    %v125 = vld [vmem:[#allocation7 + $0x8] sm:$0xff]
    %v126 = vld [vmem:[#allocation7 + $0x10] sm:$0xff]
    %v127 = vld [vmem:[#allocation7 + $0x18] sm:$0xff]
    %v128 = vld [vmem:[#allocation7 + $0x20] sm:$0xff]
    %v129 = vld [vmem:[#allocation7 + $0x28] sm:$0xff]
    %v130 = vld [vmem:[#allocation7 + $0x30] sm:$0x11]
    %v131 = vld [vmem:[#allocation7 + $0x38] sm:$0x11]
    %v132 = vld [vmem:[#allocation7 + $0x40] sm:$0x11]
    %v142 = vunpack.c.l.b16 %v124
    %v143 = vunpack.c.h.b16 %v124
    %v144 = vunpack.c.l.b16 %v125
    %v145 = vunpack.c.h.b16 %v125
    %v146 = vunpack.c.l.b16 %v126
    %v147 = vunpack.c.h.b16 %v126
    %v148 = vunpack.c.l.b16 %v127
    %v149 = vunpack.c.h.b16 %v127
    %v150 = vunpack.c.l.b16 %v128
    %v151 = vunpack.c.h.b16 %v128
    %v152 = vunpack.c.l.b16 %v129
    %v153 = vunpack.c.h.b16 %v129
    %v154 = vunpack.c.l.b16 %v130
    %v155 = vunpack.c.h.b16 %v130
    %v156 = vunpack.c.l.b16 %v131
    %v157 = vunpack.c.h.b16 %v131
    %v158 = vunpack.c.l.b16 %v132
    %v159 = vunpack.c.h.b16 %v132
    %v160 = vpack.c.b16 %v148, %v142
    %v161 = vpack.c.b16 %v149, %v143
    %v162 = vpack.c.b16 %v150, %v144
    %v163 = vpack.c.b16 %v151, %v145
    %v164 = vpack.c.b16 %v152, %v146
    %v165 = vpack.c.b16 %v153, %v147
    %v166 = vpack.c.b16 %v154, %v154
    %v167 = vpack.c.b16 %v155, %v155
    %v168 = vpack.c.b16 %v156, %v156
    %v169 = vpack.c.b16 %v157, %v157
    %v170 = vpack.c.b16 %v158, %v158
    %v171 = vpack.c.b16 %v159, %v159
    %vm178 = vcmask 146432
    %v180 = vsel %vm178, %v123, 0
    %vm182 = vcmask 1040384
    %v184 = vsel %vm182, %v166, 0
    %v187 = vsel %vm182, %v167, 0
    %v190 = vsel %vm182, %v168, 0
    %v193 = vsel %vm182, %v169, 0
    %v196 = vsel %vm182, %v170, 0
    %v199 = vsel %vm182, %v171, 0
    %201 = vmatpush.bf16.msra.mxu0 0
    %202 = vmatpush.bf16.msra.mxu0 0
    %203 = vmatpush.bf16.msra.mxu0 0
    %204 = vmatpush.bf16.msra.mxu0 0
    %205 = vmatpush.bf16.msra.mxu0 0
    %206 = vmatpush.bf16.msra.mxu0 0
    %207 = vmatpush.bf16.msra.mxu0 %v184
    %208 = vmatpush.bf16.msra.mxu0 %v160
    %209 = vmatmul.bf16.gmra.mxu0 %v180
    %v210 = vpop.f32.mrf.mxu0
    %v211 = vadd.f32 0.0, %v210
    %v212 = vpop.f32.mrf.mxu0
    %213 = vdwg.mxu0
    %214 = vmatpush.bf16.msra.mxu0 0
    %215 = vmatpush.bf16.msra.mxu0 0
    %216 = vmatpush.bf16.msra.mxu0 0
    %217 = vmatpush.bf16.msra.mxu0 0
    %218 = vmatpush.bf16.msra.mxu0 0
    %219 = vmatpush.bf16.msra.mxu0 0
    %220 = vmatpush.bf16.msra.mxu0 %v187
    %221 = vmatpush.bf16.msra.mxu0 %v161
    %222 = vmatmul.bf16.gmra.mxu0 %v180
    %v223 = vpop.f32.mrf.mxu0
    %v224 = vadd.f32 0.0, %v223
    %v225 = vpop.f32.mrf.mxu0
    %226 = vdwg.mxu0
    %227 = vmatpush.bf16.msra.mxu0 0
    %228 = vmatpush.bf16.msra.mxu0 0
    %229 = vmatpush.bf16.msra.mxu0 0
    %230 = vmatpush.bf16.msra.mxu0 0
    %231 = vmatpush.bf16.msra.mxu0 0
    %232 = vmatpush.bf16.msra.mxu0 0
    %233 = vmatpush.bf16.msra.mxu0 %v190
    %234 = vmatpush.bf16.msra.mxu0 %v162
    %235 = vmatmul.bf16.gmra.mxu0 %v180
    %v236 = vpop.f32.mrf.mxu0
    %v237 = vadd.f32 0.0, %v236
    %v238 = vpop.f32.mrf.mxu0
    %239 = vdwg.mxu0
    %240 = vmatpush.bf16.msra.mxu0 0
    %241 = vmatpush.bf16.msra.mxu0 0
    %242 = vmatpush.bf16.msra.mxu0 0
    %243 = vmatpush.bf16.msra.mxu0 0
    %244 = vmatpush.bf16.msra.mxu0 0
    %245 = vmatpush.bf16.msra.mxu0 0
    %246 = vmatpush.bf16.msra.mxu0 %v193
    %247 = vmatpush.bf16.msra.mxu0 %v163
    %248 = vmatmul.bf16.gmra.mxu0 %v180
    %v249 = vpop.f32.mrf.mxu0
    %v250 = vadd.f32 0.0, %v249
    %v251 = vpop.f32.mrf.mxu0
    %252 = vdwg.mxu0
    %253 = vmatpush.bf16.msra.mxu0 0
    %254 = vmatpush.bf16.msra.mxu0 0
    %255 = vmatpush.bf16.msra.mxu0 0
    %256 = vmatpush.bf16.msra.mxu0 0
    %257 = vmatpush.bf16.msra.mxu0 0
    %258 = vmatpush.bf16.msra.mxu0 0
    %259 = vmatpush.bf16.msra.mxu0 %v196
    %260 = vmatpush.bf16.msra.mxu0 %v164
    %261 = vmatmul.bf16.gmra.mxu0 %v180
    %v262 = vpop.f32.mrf.mxu0
    %v263 = vadd.f32 0.0, %v262
    %v264 = vpop.f32.mrf.mxu0
    %265 = vdwg.mxu0
    %266 = vmatpush.bf16.msra.mxu0 0
    %267 = vmatpush.bf16.msra.mxu0 0
    %268 = vmatpush.bf16.msra.mxu0 0
    %269 = vmatpush.bf16.msra.mxu0 0
    %270 = vmatpush.bf16.msra.mxu0 0
    %271 = vmatpush.bf16.msra.mxu0 0
    %272 = vmatpush.bf16.msra.mxu0 %v199
    %273 = vmatpush.bf16.msra.mxu0 %v165
    %274 = vmatmul.bf16.gmra.mxu0 %v180
    %v275 = vpop.f32.mrf.mxu0
    %v276 = vadd.f32 0.0, %v275
    %v277 = vpop.f32.mrf.mxu0
    %278 = vdwg.mxu0
    %v279 = vld [vmem:[#allocation5] sm:$0x3f]
    %v281 = vperm.slane %v279, 0
    %v282 = vperm.slane %v279, 1
    %v283 = vperm.slane %v279, 2
    %v284 = vperm.slane %v279, 3
    %v285 = vperm.slane %v279, 4
    %v286 = vperm.slane %v279, 5
    %vm293 = vcmp.eq.f32.partialorder %v211, %v281
    %vm294 = vcmp.eq.f32.partialorder %v224, %v282
    %vm295 = vcmp.eq.f32.partialorder %v237, %v283
    %vm296 = vcmp.eq.f32.partialorder %v250, %v284
    %vm297 = vcmp.eq.f32.partialorder %v263, %v285
    %vm298 = vcmp.eq.f32.partialorder %v276, %v286
    %v299 = vsel %vm293, 1, 0
    %v300 = vsel %vm294, 1, 0
    %v301 = vsel %vm295, 1, 0
    %v302 = vsel %vm296, 1, 0
    %v303 = vsel %vm297, 1, 0
    %v304 = vsel %vm298, 1, 0
    %v305 = vcvt.s32.f32 %v299
    %v306 = vcvt.s32.f32 %v300
    %v307 = vcvt.s32.f32 %v301
    %v308 = vcvt.s32.f32 %v302
    %v309 = vcvt.s32.f32 %v303
    %v310 = vcvt.s32.f32 %v304
    %v311 = vpack.c.bf16 %v305, %v305
    %v312 = vpack.c.bf16 %v306, %v306
    %v313 = vpack.c.bf16 %v307, %v307
    %v314 = vpack.c.bf16 %v308, %v308
    %v315 = vpack.c.bf16 %v309, %v309
    %v316 = vpack.c.bf16 %v310, %v310
    %v317 = vld [vmem:[#allocation8] sm:$0xf]
    %v318 = vld [vmem:[#allocation8 + $0x4] sm:$0xf]
    %v319 = vld [vmem:[#allocation8 + $0x8] sm:$0xf]
    %v320 = vld [vmem:[#allocation8 + $0xc] sm:$0xf]
    %v321 = vld [vmem:[#allocation8 + $0x10] sm:$0xf]
    %v322 = vld [vmem:[#allocation8 + $0x14] sm:$0xf]
    %v323 = vld [vmem:[#allocation8 + $0x18] sm:$0xf]
    %v324 = vld [vmem:[#allocation8 + $0x1c] sm:$0xf]
    %v325 = vld [vmem:[#allocation8 + $0x20] sm:$0xf]
    %v326 = vld [vmem:[#allocation8 + $0x24] sm:$0xf]
    %v327 = vld [vmem:[#allocation8 + $0x28] sm:$0xf]
    %v328 = vld [vmem:[#allocation8 + $0x2c] sm:$0xf]
    %v329 = vld [vmem:[#allocation8 + $0x30] sm:$0xf]
    %v330 = vld [vmem:[#allocation8 + $0x34] sm:$0xf]
    %v331 = vld [vmem:[#allocation8 + $0x38] sm:$0xf]
    %v332 = vld [vmem:[#allocation8 + $0x3c] sm:$0xf]
    %v333 = vld [vmem:[#allocation8 + $0x40] sm:$0xf]
    %v334 = vld [vmem:[#allocation8 + $0x44] sm:$0xf]
    %v335 = vld [vmem:[#allocation8 + $0x48] sm:$0xf]
    %v336 = vld [vmem:[#allocation8 + $0x4c] sm:$0xf]
    %v337 = vld [vmem:[#allocation8 + $0x50] sm:$0xf]
    %v338 = vld [vmem:[#allocation8 + $0x54] sm:$0xf]
    %v339 = vld [vmem:[#allocation8 + $0x58] sm:$0xf]
    %v340 = vld [vmem:[#allocation8 + $0x5c] sm:$0xf]
    %v341 = vld [vmem:[#allocation8 + $0x60] sm:$0xf]
    %v342 = vld [vmem:[#allocation8 + $0x64] sm:$0xf]
    %v343 = vld [vmem:[#allocation8 + $0x68] sm:$0xf]
    %v344 = vld [vmem:[#allocation8 + $0x6c] sm:$0xf]
    %v345 = vld [vmem:[#allocation8 + $0x70] sm:$0xf]
    %v346 = vld [vmem:[#allocation8 + $0x74] sm:$0xf]
    %v347 = vld [vmem:[#allocation8 + $0x78] sm:$0xf]
    %v348 = vld [vmem:[#allocation8 + $0x7c] sm:$0xf]
    %v349 = vld [vmem:[#allocation8 + $0x80] sm:$0xf]
    %v350 = vld [vmem:[#allocation8 + $0x84] sm:$0xf]
    %v351 = vld [vmem:[#allocation8 + $0x88] sm:$0xf]
    %v352 = vld [vmem:[#allocation8 + $0x8c] sm:$0xf]
    %v353 = vld [vmem:[#allocation8 + $0x90] sm:$0xf]
    %v354 = vld [vmem:[#allocation8 + $0x94] sm:$0xf]
    %v355 = vld [vmem:[#allocation8 + $0x98] sm:$0xf]
    %v356 = vld [vmem:[#allocation8 + $0x9c] sm:$0xf]
    %v357 = vld [vmem:[#allocation8 + $0xa0] sm:$0xf]
    %v358 = vld [vmem:[#allocation8 + $0xa4] sm:$0xf]
    %v359 = vld [vmem:[#allocation8 + $0xa8] sm:$0xf]
    %v360 = vld [vmem:[#allocation8 + $0xac] sm:$0xf]
    %v361 = vld [vmem:[#allocation8 + $0xb0] sm:$0xf]
    %v362 = vld [vmem:[#allocation8 + $0xb4] sm:$0xf]
    %v363 = vld [vmem:[#allocation8 + $0xb8] sm:$0xf]
    %v364 = vld [vmem:[#allocation8 + $0xbc] sm:$0xf]
    %v365 = vld [vmem:[#allocation8 + $0xc0] sm:$0xf]
    %v366 = vld [vmem:[#allocation8 + $0xc4] sm:$0xf]
    %v367 = vld [vmem:[#allocation8 + $0xc8] sm:$0xf]
    %v368 = vld [vmem:[#allocation8 + $0xcc] sm:$0xf]
    %v369 = vld [vmem:[#allocation8 + $0xd0] sm:$0xf]
    %v370 = vld [vmem:[#allocation8 + $0xd4] sm:$0xf]
    %v371 = vld [vmem:[#allocation8 + $0xd8] sm:$0xf]
    %v372 = vld [vmem:[#allocation8 + $0xdc] sm:$0xf]
    %v373 = vld [vmem:[#allocation8 + $0xe0] sm:$0xf]
    %v374 = vld [vmem:[#allocation8 + $0xe4] sm:$0xf]
    %v375 = vld [vmem:[#allocation8 + $0xe8] sm:$0xf]
    %v376 = vld [vmem:[#allocation8 + $0xec] sm:$0xf]
    %v377 = vld [vmem:[#allocation8 + $0xf0] sm:$0xf]
    %v378 = vld [vmem:[#allocation8 + $0xf4] sm:$0xf]
    %v379 = vld [vmem:[#allocation8 + $0xf8] sm:$0xf]
    %v380 = vld [vmem:[#allocation8 + $0xfc] sm:$0xf]
    %v381 = vld [vmem:[#allocation8 + $0x100] sm:$0xf]
    %v382 = vld [vmem:[#allocation8 + $0x104] sm:$0xf]
    %v383 = vld [vmem:[#allocation8 + $0x108] sm:$0xf]
    %v384 = vld [vmem:[#allocation8 + $0x10c] sm:$0xf]
    %v385 = vld [vmem:[#allocation8 + $0x110] sm:$0xf]
    %v386 = vld [vmem:[#allocation8 + $0x114] sm:$0xf]
    %v387 = vld [vmem:[#allocation8 + $0x118] sm:$0xf]
    %v388 = vld [vmem:[#allocation8 + $0x11c] sm:$0xf]
    %v389 = vld [vmem:[#allocation8 + $0x120] sm:$0xf]
    %v390 = vld [vmem:[#allocation8 + $0x124] sm:$0xf]
    %v391 = vld [vmem:[#allocation8 + $0x128] sm:$0xf]
    %v392 = vld [vmem:[#allocation8 + $0x12c] sm:$0xf]
    %v393 = vld [vmem:[#allocation8 + $0x130] sm:$0xf]
    %v394 = vld [vmem:[#allocation8 + $0x134] sm:$0xf]
    %v395 = vld [vmem:[#allocation8 + $0x138] sm:$0xf]
    %v396 = vld [vmem:[#allocation8 + $0x13c] sm:$0xf]
    %v397 = vld [vmem:[#allocation8 + $0x140] sm:$0xf]
    %v398 = vld [vmem:[#allocation8 + $0x144] sm:$0xf]
    %v399 = vld [vmem:[#allocation8 + $0x148] sm:$0xf]
    %v400 = vld [vmem:[#allocation8 + $0x14c] sm:$0xf]
    %v401 = vld [vmem:[#allocation8 + $0x150] sm:$0xf]
    %v402 = vld [vmem:[#allocation8 + $0x154] sm:$0xf]
    %v403 = vld [vmem:[#allocation8 + $0x158] sm:$0xf]
    %v404 = vld [vmem:[#allocation8 + $0x15c] sm:$0xf]
    %v405 = vld [vmem:[#allocation8 + $0x160] sm:$0xf]
    %v406 = vld [vmem:[#allocation8 + $0x164] sm:$0xf]
    %v407 = vld [vmem:[#allocation8 + $0x168] sm:$0xf]
    %v408 = vld [vmem:[#allocation8 + $0x16c] sm:$0xf]
    %v409 = vld [vmem:[#allocation8 + $0x170] sm:$0xf]
    %v410 = vld [vmem:[#allocation8 + $0x174] sm:$0xf]
    %v411 = vld [vmem:[#allocation8 + $0x178] sm:$0xf]
    %v412 = vld [vmem:[#allocation8 + $0x17c] sm:$0xf]
    %v509 = vunpack.c.l.b16 %v317
    %v510 = vunpack.c.l.b16 %v318
    %v511 = vunpack.c.l.b16 %v319
    %v512 = vunpack.c.l.b16 %v320
    %v513 = vunpack.c.l.b16 %v321
    %v514 = vunpack.c.l.b16 %v322
    %v515 = vunpack.c.l.b16 %v323
    %v516 = vunpack.c.l.b16 %v324
    %v517 = vunpack.c.l.b16 %v325
    %v518 = vunpack.c.l.b16 %v326
    %v519 = vunpack.c.l.b16 %v327
    %v520 = vunpack.c.l.b16 %v328
    %v521 = vunpack.c.l.b16 %v329
    %v522 = vunpack.c.l.b16 %v330
    %v523 = vunpack.c.l.b16 %v331
    %v524 = vunpack.c.l.b16 %v332
    %v525 = vunpack.c.l.b16 %v333
    %v526 = vunpack.c.l.b16 %v334
    %v527 = vunpack.c.l.b16 %v335
    %v528 = vunpack.c.l.b16 %v336
    %v529 = vunpack.c.l.b16 %v337
    %v530 = vunpack.c.l.b16 %v338
    %v531 = vunpack.c.l.b16 %v339
    %v532 = vunpack.c.l.b16 %v340
    %v533 = vunpack.c.l.b16 %v341
    %v534 = vunpack.c.l.b16 %v342
    %v535 = vunpack.c.l.b16 %v343
    %v536 = vunpack.c.l.b16 %v344
    %v537 = vunpack.c.l.b16 %v345
    %v538 = vunpack.c.l.b16 %v346
    %v539 = vunpack.c.l.b16 %v347
    %v540 = vunpack.c.l.b16 %v348
    %v541 = vunpack.c.l.b16 %v349
    %v542 = vunpack.c.l.b16 %v350
    %v543 = vunpack.c.l.b16 %v351
    %v544 = vunpack.c.l.b16 %v352
    %v545 = vunpack.c.l.b16 %v353
    %v546 = vunpack.c.l.b16 %v354
    %v547 = vunpack.c.l.b16 %v355
    %v548 = vunpack.c.l.b16 %v356
    %v549 = vunpack.c.l.b16 %v357
    %v550 = vunpack.c.l.b16 %v358
    %v551 = vunpack.c.l.b16 %v359
    %v552 = vunpack.c.l.b16 %v360
    %v553 = vunpack.c.l.b16 %v361
    %v554 = vunpack.c.l.b16 %v362
    %v555 = vunpack.c.l.b16 %v363
    %v556 = vunpack.c.l.b16 %v364
    %v557 = vunpack.c.l.b16 %v365
    %v558 = vunpack.c.l.b16 %v366
    %v559 = vunpack.c.l.b16 %v367
    %v560 = vunpack.c.l.b16 %v368
    %v561 = vunpack.c.l.b16 %v369
    %v562 = vunpack.c.l.b16 %v370
    %v563 = vunpack.c.l.b16 %v371
    %v564 = vunpack.c.l.b16 %v372
    %v565 = vunpack.c.l.b16 %v373
    %v566 = vunpack.c.l.b16 %v374
    %v567 = vunpack.c.l.b16 %v375
    %v568 = vunpack.c.l.b16 %v376
    %v569 = vunpack.c.l.b16 %v377
    %v570 = vunpack.c.l.b16 %v378
    %v571 = vunpack.c.l.b16 %v379
    %v572 = vunpack.c.l.b16 %v380
    %v573 = vunpack.c.l.b16 %v381
    %v574 = vunpack.c.l.b16 %v382
    %v575 = vunpack.c.l.b16 %v383
    %v576 = vunpack.c.l.b16 %v384
    %v577 = vunpack.c.l.b16 %v385
    %v578 = vunpack.c.l.b16 %v386
    %v579 = vunpack.c.l.b16 %v387
    %v580 = vunpack.c.l.b16 %v388
    %v581 = vunpack.c.l.b16 %v389
    %v582 = vunpack.c.l.b16 %v390
    %v583 = vunpack.c.l.b16 %v391
    %v584 = vunpack.c.l.b16 %v392
    %v585 = vunpack.c.l.b16 %v393
    %v586 = vunpack.c.l.b16 %v394
    %v587 = vunpack.c.l.b16 %v395
    %v588 = vunpack.c.l.b16 %v396
    %v589 = vunpack.c.l.b16 %v397
    %v590 = vunpack.c.l.b16 %v398
    %v591 = vunpack.c.l.b16 %v399
    %v592 = vunpack.c.l.b16 %v400
    %v593 = vunpack.c.l.b16 %v401
    %v594 = vunpack.c.l.b16 %v402
    %v595 = vunpack.c.l.b16 %v403
    %v596 = vunpack.c.l.b16 %v404
    %v597 = vunpack.c.l.b16 %v405
    %v598 = vunpack.c.l.b16 %v406
    %v599 = vunpack.c.l.b16 %v407
    %v600 = vunpack.c.l.b16 %v408
    %v601 = vunpack.c.l.b16 %v409
    %v602 = vunpack.c.l.b16 %v410
    %v603 = vunpack.c.l.b16 %v411
    %v604 = vunpack.c.l.b16 %v412
    %v605 = vpack.c.b16 %v510, %v509
    %v606 = vpack.c.b16 %v512, %v511
    %v607 = vpack.c.b16 %v514, %v513
    %v608 = vpack.c.b16 %v516, %v515
    %v609 = vpack.c.b16 %v518, %v517
    %v610 = vpack.c.b16 %v520, %v519
    %v611 = vpack.c.b16 %v522, %v521
    %v612 = vpack.c.b16 %v524, %v523
    %v613 = vpack.c.b16 %v526, %v525
    %v614 = vpack.c.b16 %v528, %v527
    %v615 = vpack.c.b16 %v530, %v529
    %v616 = vpack.c.b16 %v532, %v531
    %v617 = vpack.c.b16 %v534, %v533
    %v618 = vpack.c.b16 %v536, %v535
    %v619 = vpack.c.b16 %v538, %v537
    %v620 = vpack.c.b16 %v540, %v539
    %v621 = vpack.c.b16 %v542, %v541
    %v622 = vpack.c.b16 %v544, %v543
    %v623 = vpack.c.b16 %v546, %v545
    %v624 = vpack.c.b16 %v548, %v547
    %v625 = vpack.c.b16 %v550, %v549
    %v626 = vpack.c.b16 %v552, %v551
    %v627 = vpack.c.b16 %v554, %v553
    %v628 = vpack.c.b16 %v556, %v555
    %v629 = vpack.c.b16 %v558, %v557
    %v630 = vpack.c.b16 %v560, %v559
    %v631 = vpack.c.b16 %v562, %v561
    %v632 = vpack.c.b16 %v564, %v563
    %v633 = vpack.c.b16 %v566, %v565
    %v634 = vpack.c.b16 %v568, %v567
    %v635 = vpack.c.b16 %v570, %v569
    %v636 = vpack.c.b16 %v572, %v571
    %v637 = vpack.c.b16 %v574, %v573
    %v638 = vpack.c.b16 %v576, %v575
    %v639 = vpack.c.b16 %v578, %v577
    %v640 = vpack.c.b16 %v580, %v579
    %v641 = vpack.c.b16 %v582, %v581
    %v642 = vpack.c.b16 %v584, %v583
    %v643 = vpack.c.b16 %v586, %v585
    %v644 = vpack.c.b16 %v588, %v587
    %v645 = vpack.c.b16 %v590, %v589
    %v646 = vpack.c.b16 %v592, %v591
    %v647 = vpack.c.b16 %v594, %v593
    %v648 = vpack.c.b16 %v596, %v595
    %v649 = vpack.c.b16 %v598, %v597
    %v650 = vpack.c.b16 %v600, %v599
    %v651 = vpack.c.b16 %v602, %v601
    %v652 = vpack.c.b16 %v604, %v603
    %701 = vmatpush.bf16.msra.mxu0 %v612
    %702 = vmatpush.bf16.msra.mxu0 %v611
    %703 = vmatpush.bf16.msra.mxu0 %v610
    %704 = vmatpush.bf16.msra.mxu0 %v609
    %705 = vmatpush.bf16.msra.mxu0 %v608
    %706 = vmatpush.bf16.msra.mxu0 %v607
    %707 = vmatpush.bf16.msra.mxu0 %v606
    %708 = vmatpush.bf16.msra.mxu0 %v605
    %709 = vmatmul.bf16.gmra.mxu0 %v311
    %v710 = vpop.f32.mrf.mxu0
    %v711 = vadd.f32 0.0, %v710
    %v712 = vpop.f32.mrf.mxu0
    %713 = vdwg.mxu0
    %714 = vmatpush.bf16.msra.mxu0 %v620
    %715 = vmatpush.bf16.msra.mxu0 %v619
    %716 = vmatpush.bf16.msra.mxu0 %v618
    %717 = vmatpush.bf16.msra.mxu0 %v617
    %718 = vmatpush.bf16.msra.mxu0 %v616
    %719 = vmatpush.bf16.msra.mxu0 %v615
    %720 = vmatpush.bf16.msra.mxu0 %v614
    %721 = vmatpush.bf16.msra.mxu0 %v613
    %722 = vmatmul.bf16.gmra.mxu0 %v312
    %v723 = vpop.f32.mrf.mxu0
    %v724 = vadd.f32 %v711, %v723
    %v725 = vpop.f32.mrf.mxu0
    %726 = vdwg.mxu0
    %727 = vmatpush.bf16.msra.mxu0 %v628
    %728 = vmatpush.bf16.msra.mxu0 %v627
    %729 = vmatpush.bf16.msra.mxu0 %v626
    %730 = vmatpush.bf16.msra.mxu0 %v625
    %731 = vmatpush.bf16.msra.mxu0 %v624
    %732 = vmatpush.bf16.msra.mxu0 %v623
    %733 = vmatpush.bf16.msra.mxu0 %v622
    %734 = vmatpush.bf16.msra.mxu0 %v621
    %735 = vmatmul.bf16.gmra.mxu0 %v313
    %v736 = vpop.f32.mrf.mxu0
    %v737 = vadd.f32 %v724, %v736
    %v738 = vpop.f32.mrf.mxu0
    %739 = vdwg.mxu0
    %740 = vmatpush.bf16.msra.mxu0 %v636
    %741 = vmatpush.bf16.msra.mxu0 %v635
    %742 = vmatpush.bf16.msra.mxu0 %v634
    %743 = vmatpush.bf16.msra.mxu0 %v633
    %744 = vmatpush.bf16.msra.mxu0 %v632
    %745 = vmatpush.bf16.msra.mxu0 %v631
    %746 = vmatpush.bf16.msra.mxu0 %v630
    %747 = vmatpush.bf16.msra.mxu0 %v629
    %748 = vmatmul.bf16.gmra.mxu0 %v314
    %v749 = vpop.f32.mrf.mxu0
    %v750 = vadd.f32 %v737, %v749
    %v751 = vpop.f32.mrf.mxu0
    %752 = vdwg.mxu0
    %753 = vmatpush.bf16.msra.mxu0 %v644
    %754 = vmatpush.bf16.msra.mxu0 %v643
    %755 = vmatpush.bf16.msra.mxu0 %v642
    %756 = vmatpush.bf16.msra.mxu0 %v641
    %757 = vmatpush.bf16.msra.mxu0 %v640
    %758 = vmatpush.bf16.msra.mxu0 %v639
    %759 = vmatpush.bf16.msra.mxu0 %v638
    %760 = vmatpush.bf16.msra.mxu0 %v637
    %761 = vmatmul.bf16.gmra.mxu0 %v315
    %v762 = vpop.f32.mrf.mxu0
    %v763 = vadd.f32 %v750, %v762
    %v764 = vpop.f32.mrf.mxu0
    %765 = vdwg.mxu0
    %766 = vmatpush.bf16.msra.mxu0 %v652
    %767 = vmatpush.bf16.msra.mxu0 %v651
    %768 = vmatpush.bf16.msra.mxu0 %v650
    %769 = vmatpush.bf16.msra.mxu0 %v649
    %770 = vmatpush.bf16.msra.mxu0 %v648
    %771 = vmatpush.bf16.msra.mxu0 %v647
    %772 = vmatpush.bf16.msra.mxu0 %v646
    %773 = vmatpush.bf16.msra.mxu0 %v645
    %774 = vmatmul.bf16.gmra.mxu0 %v316
    %v775 = vpop.f32.mrf.mxu0
    %v776 = vadd.f32 %v763, %v775
    %v777 = vpop.f32.mrf.mxu0
    %778 = vdwg.mxu0
    %v779 = vsub.f32 0.0, %v776
    %v780 = vmul.f32 %v779, 1.442695
    %v781 = vpow.pop %v780
    %v782 = vadd.f32 %v781, 1.0
    %v783 = vrcp.pop %v782
    %v784 = vpack.c.bf16 %v783, %v783
    %v785 = vld [vmem:[#allocation10] sm:$0xf]
    %v786 = vld [vmem:[#allocation10 + $0x4] sm:$0xf]
    %v787 = vld [vmem:[#allocation10 + $0x8] sm:$0xf]
    %v788 = vld [vmem:[#allocation10 + $0xc] sm:$0xf]
    %v789 = vld [vmem:[#allocation10 + $0x10] sm:$0xf]
    %v790 = vld [vmem:[#allocation10 + $0x14] sm:$0xf]
    %v791 = vld [vmem:[#allocation10 + $0x18] sm:$0xf]
    %v792 = vld [vmem:[#allocation10 + $0x1c] sm:$0xf]
    %v793 = vld [vmem:[#allocation10 + $0x20] sm:$0xf]
    %v794 = vld [vmem:[#allocation10 + $0x24] sm:$0xf]
    %v795 = vld [vmem:[#allocation10 + $0x28] sm:$0xf]
    %v796 = vld [vmem:[#allocation10 + $0x2c] sm:$0xf]
    %v797 = vld [vmem:[#allocation10 + $0x30] sm:$0xf]
    %v798 = vld [vmem:[#allocation10 + $0x34] sm:$0xf]
    %v799 = vld [vmem:[#allocation10 + $0x38] sm:$0xf]
    %v800 = vld [vmem:[#allocation10 + $0x3c] sm:$0xf]
    %v801 = vld [vmem:[%s5] sm:$0x1]
    %v803 = vperm.slane %v801, 0
    %v821 = vunpack.c.l.b16 %v785
    %v822 = vunpack.c.l.b16 %v786
    %v823 = vunpack.c.l.b16 %v787
    %v824 = vunpack.c.l.b16 %v788
    %v825 = vunpack.c.l.b16 %v789
    %v826 = vunpack.c.l.b16 %v790
    %v827 = vunpack.c.l.b16 %v791
    %v828 = vunpack.c.l.b16 %v792
    %v829 = vunpack.c.l.b16 %v793
    %v830 = vunpack.c.l.b16 %v794
    %v831 = vunpack.c.l.b16 %v795
    %v832 = vunpack.c.l.b16 %v796
    %v833 = vunpack.c.l.b16 %v797
    %v834 = vunpack.c.l.b16 %v798
    %v835 = vunpack.c.l.b16 %v799
    %v836 = vunpack.c.l.b16 %v800
    %v837 = vpack.c.b16 %v822, %v821
    %v838 = vpack.c.b16 %v824, %v823
    %v839 = vpack.c.b16 %v826, %v825
    %v840 = vpack.c.b16 %v828, %v827
    %v841 = vpack.c.b16 %v830, %v829
    %v842 = vpack.c.b16 %v832, %v831
    %v843 = vpack.c.b16 %v834, %v833
    %v844 = vpack.c.b16 %v836, %v835
    %853 = vmatpush.bf16.msra.mxu0 %v844
    %854 = vmatpush.bf16.msra.mxu0 %v843
    %855 = vmatpush.bf16.msra.mxu0 %v842
    %856 = vmatpush.bf16.msra.mxu0 %v841
    %857 = vmatpush.bf16.msra.mxu0 %v840
    %858 = vmatpush.bf16.msra.mxu0 %v839
    %859 = vmatpush.bf16.msra.mxu0 %v838
    %860 = vmatpush.bf16.msra.mxu0 %v837
    %861 = vmatmul.bf16.gmra.mxu0 %v784
    %v862 = vpop.f32.mrf.mxu0
    %v863 = vadd.f32 %v803, %v862
    %v864 = vpop.f32.mrf.mxu0
    %865 = vdwg.mxu0
    %v866 = vsub.f32 0.0, %v863
    %v867 = vmul.f32 %v866, 1.442695
    %v868 = vpow.pop %v867
    %v869 = vadd.f32 %v868, 1.0
    %v870 = vrcp.pop %v869
    %v871 = vpack.c.bf16 %v870, %v870
    %v872 = vld [vmem:[#allocation11] sm:$0xf]
    %v873 = vld [vmem:[#allocation11 + $0x4] sm:$0xf]
    %v874 = vld [vmem:[#allocation11 + $0x8] sm:$0xf]
    %v875 = vld [vmem:[#allocation11 + $0xc] sm:$0xf]
    %v876 = vld [vmem:[#allocation11 + $0x10] sm:$0xf]
    %v877 = vld [vmem:[#allocation11 + $0x14] sm:$0xf]
    %v878 = vld [vmem:[#allocation11 + $0x18] sm:$0xf]
    %v879 = vld [vmem:[#allocation11 + $0x1c] sm:$0xf]
    %v880 = vld [vmem:[#allocation11 + $0x20] sm:$0xf]
    %v881 = vld [vmem:[#allocation11 + $0x24] sm:$0xf]
    %v882 = vld [vmem:[#allocation11 + $0x28] sm:$0xf]
    %v883 = vld [vmem:[#allocation11 + $0x2c] sm:$0xf]
    %v884 = vld [vmem:[#allocation11 + $0x30] sm:$0xf]
    %v885 = vld [vmem:[#allocation11 + $0x34] sm:$0xf]
    %v886 = vld [vmem:[#allocation11 + $0x38] sm:$0xf]
    %v887 = vld [vmem:[#allocation11 + $0x3c] sm:$0xf]
    %v888 = vld [vmem:[%s7] sm:$0x1]
    %v890 = vperm.slane %v888, 0
    %v908 = vunpack.c.l.b16 %v872
    %v909 = vunpack.c.l.b16 %v873
    %v910 = vunpack.c.l.b16 %v874
    %v911 = vunpack.c.l.b16 %v875
    %v912 = vunpack.c.l.b16 %v876
    %v913 = vunpack.c.l.b16 %v877
    %v914 = vunpack.c.l.b16 %v878
    %v915 = vunpack.c.l.b16 %v879
    %v916 = vunpack.c.l.b16 %v880
    %v917 = vunpack.c.l.b16 %v881
    %v918 = vunpack.c.l.b16 %v882
    %v919 = vunpack.c.l.b16 %v883
    %v920 = vunpack.c.l.b16 %v884
    %v921 = vunpack.c.l.b16 %v885
    %v922 = vunpack.c.l.b16 %v886
    %v923 = vunpack.c.l.b16 %v887
    %v924 = vpack.c.b16 %v909, %v908
    %v925 = vpack.c.b16 %v911, %v910
    %v926 = vpack.c.b16 %v913, %v912
    %v927 = vpack.c.b16 %v915, %v914
    %v928 = vpack.c.b16 %v917, %v916
    %v929 = vpack.c.b16 %v919, %v918
    %v930 = vpack.c.b16 %v921, %v920
    %v931 = vpack.c.b16 %v923, %v922
    %940 = vmatpush.bf16.msra.mxu0 %v931
    %941 = vmatpush.bf16.msra.mxu0 %v930
    %942 = vmatpush.bf16.msra.mxu0 %v929
    %943 = vmatpush.bf16.msra.mxu0 %v928
    %944 = vmatpush.bf16.msra.mxu0 %v927
    %945 = vmatpush.bf16.msra.mxu0 %v926
    %946 = vmatpush.bf16.msra.mxu0 %v925
    %947 = vmatpush.bf16.msra.mxu0 %v924
    %948 = vmatmul.bf16.gmra.mxu0 %v871
    %v949 = vpop.f32.mrf.mxu0
    %v950 = vadd.f32 %v890, %v949
    %v951 = vpop.f32.mrf.mxu0
    %952 = vdwg.mxu0
    %v953 = vsub.f32 0.0, %v950
    %v954 = vmul.f32 %v953, 1.442695
    %v955 = vpow.pop %v954
    %v956 = vadd.f32 %v955, 1.0
    %v957 = vrcp.pop %v956
    %958 = vst [vmem:[#allocation13] sm:$0xff] %v957
    // Predicated region
    $region58: #{tpu_custom_call.1} parent=1 // pred_check
      _
    $region59: #{tpu_custom_call.1} parent=1 // pred_check_branch
      %960 = sbr.rel (0) target = $region61
    $region60: #{tpu_custom_call.1} parent=1 // pred_region
      %962 = vsyncadd [#allocation4], 0
      %s964 = sshll.u32 [#allocation13], 4
      %s965 = int_to_ptr.vmem [resolvable:$true] %s964
      %s966 = sshll.u32 %s8, 4
      %s967 = int_to_ptr.hbm [resolvable:$true] %s966
      %969 = dma.vmem_to_hbm [thread:$0]  %s965, 128, %s967, [#allocation4]
    $region61: #{tpu_custom_call.1} parent=1 // pred_fallthru
      _
    // Predicated region
    $region62: #{tpu_custom_call.1} parent=1 // pred_check
      _
    $region63: #{tpu_custom_call.1} parent=1 // pred_check_branch
      %971 = sbr.rel (0) target = $region65
    $region64: #{tpu_custom_call.1} parent=1 // pred_region
      %973 = dma.done [#allocation4], 128
    $region65: #{tpu_custom_call.1} parent=1 // pred_fallthru
      _
    %974 = vsyncpa [#allocation3], 1
    %975 = vsyncpa [#allocation6], 1
    %976 = vsyncpa [#allocation9], 1
    %977 = vsyncpa [#allocation12], 1
    %978 = vsyncpa [#allocation4], 1

</llo_original>
